<compile_context>
chip_gen: v6e
topology: v6e:2x2x1
jax: 0.10.0
libtpu: 0.0.40
codegen_flags: <defaults>
</compile_context>

<pallas_src>
import functools

import jax
import jax.numpy as jnp
from jax.experimental import pallas as pl
from jax.experimental.pallas import tpu as pltpu

WEIGHT_BIT = 8
QUANT_IT = True  # mirrors the module-level `QuantIt` flag (quantized path)
_QMAX = float(2 ** (WEIGHT_BIT - 1) - 1)   # 127
_QMIN = -float(2 ** (WEIGHT_BIT - 1))      # -128


def _round_up(x, m):
    return (x + m - 1) // m * m


def _row_tile(num_rows, dim, max_block_bytes=2 * 1024 * 1024):
    """Row tile for the table-streaming passes.

    Multiple of 32 (int8 sublane packing) and sized so the f32 input block stays
    within a conservative budget: pass 2 holds roughly 12x this block once
    double buffering and the int8/int32 outputs are counted, which fits v5e's
    16 MiB scoped-VMEM default and v7x's 64 MiB physical VMEM with headroom.
    """
    tv = (max_block_bytes // (dim * 4)) // 32 * 32
    tv = max(32, min(1024, tv))
    return min(tv, _round_up(num_rows, 32))


# ---------------------------------------------------------------------------
# Pass 1: streaming absmax -> weight_scaling_factor   s = max(|w|) / 127
# ---------------------------------------------------------------------------
def _absmax_scale_kernel(w_ref, scale_ref):
    i = pl.program_id(0)

    @pl.when(i == 0)
    def _():
        scale_ref[...] = jnp.zeros_like(scale_ref)

    scale_ref[...] = jnp.maximum(scale_ref[...], jnp.max(jnp.abs(w_ref[...])))

    @pl.when(i == pl.num_programs(0) - 1)
    def _():
        scale_ref[...] = jnp.maximum(scale_ref[...], 1e-8) / _QMAX


def compute_weight_scale(weight_padded, tv):
    vp, d = weight_padded.shape
    return pl.pallas_call(
        _absmax_scale_kernel,
        grid=(vp // tv,),
        in_specs=[pl.BlockSpec((tv, d), lambda i: (i, 0))],
        out_specs=pl.BlockSpec((1, 1), lambda i: (0, 0)),
        out_shape=jax.ShapeDtypeStruct((1, 1), jnp.float32),
        compiler_params=pltpu.CompilerParams(dimension_semantics=("arbitrary",)),
    )(weight_padded)


# ---------------------------------------------------------------------------
# Pass 2: tiled quantization -> int8 weight_integer + packed int32 gather table
#   weight_integer = clip(round(w / s), -128, 127)
#   packed[:, j]   = bytes (q[:, j], q[:, j+d4], q[:, j+2*d4], q[:, j+3*d4])
# ---------------------------------------------------------------------------
def _quantize_pack_kernel(scale_ref, w_ref, wint_ref, packed_ref):
    inv = 1.0 / scale_ref[0, 0]
    q = jnp.clip(jnp.round(w_ref[...] * inv), _QMIN, _QMAX)
    wint_ref[...] = q.astype(jnp.int8)

    # Pack 4 int8 lane-blocks into one int32 so the gather DMAs 32-bit rows and
    # the in-kernel unpack is 4 contiguous lane blocks (no lane interleave).
    qi = q.astype(jnp.int32)
    d4 = qi.shape[-1] // 4
    b0 = qi[:, 0 * d4:1 * d4] & 0xFF
    b1 = qi[:, 1 * d4:2 * d4] & 0xFF
    b2 = qi[:, 2 * d4:3 * d4] & 0xFF
    b3 = qi[:, 3 * d4:4 * d4] & 0xFF
    packed_ref[...] = b0 | (b1 << 8) | (b2 << 16) | (b3 << 24)


def quantize_and_pack(weight_padded, scale, tv):
    vp, d = weight_padded.shape
    return pl.pallas_call(
        _quantize_pack_kernel,
        grid=(vp // tv,),
        in_specs=[
            pl.BlockSpec(memory_space=pltpu.MemorySpace.SMEM),  # scale (1,1)
            pl.BlockSpec((tv, d), lambda i: (i, 0)),            # weight tile
        ],
        out_specs=(
            pl.BlockSpec((tv, d), lambda i: (i, 0)),
            pl.BlockSpec((tv, d // 4), lambda i: (i, 0)),
        ),
        out_shape=(
            jax.ShapeDtypeStruct((vp, d), jnp.int8),
            jax.ShapeDtypeStruct((vp, d // 4), jnp.int32),
        ),
        compiler_params=pltpu.CompilerParams(dimension_semantics=("parallel",)),
    )(scale, weight_padded)


# ---------------------------------------------------------------------------
# Pass 3: batched embedding gather with cross-step double-buffered row DMAs
# ---------------------------------------------------------------------------
def _gather_kernel(ids_ref, *refs, tb, nrows, packed):
    if packed:
        scale_ref, table_ref, out_ref, rows_ref, sem_ref = refs
    else:
        table_ref, out_ref, rows_ref, sem_ref = refs

    i = pl.program_id(0)
    n = pl.num_programs(0)
    slot = i % 2
    base = i * tb

    def issue(start, s):
        # Clamp defensively: torch raises on an OOB id; here it would become a
        # wild HBM DMA.  Padded tail tokens gather row 0 and are sliced off by
        # the wrapper.
        for t in range(tb):  # static unroll; copies overlap in the DMA engine
            row = jnp.minimum(jnp.maximum(ids_ref[start + t], 0), nrows - 1)
            pltpu.make_async_copy(table_ref.at[row], rows_ref.at[s, t],
                                  sem_ref.at[s]).start()

    # Warm-up: fetch this (first) step's rows.
    @pl.when(i == 0)
    def _():
        issue(base, 0)

    # Prefetch next step's rows into the other slot before touching the current
    # slot, hiding gather latency behind this step's compute + writeback.
    @pl.when(i + 1 < n)
    def _():
        issue(base + tb, (i + 1) % 2)

    # Wait for the tb copies of the current slot (one shared semaphore / slot).
    for t in range(tb):
        pltpu.make_async_copy(table_ref.at[0], rows_ref.at[slot, t],
                              sem_ref.at[slot]).wait()

    w = rows_ref[slot]
    if packed:
        s = scale_ref[0, 0]
        d4 = w.shape[-1]
        # Sign-extend each byte and dequantize: out = float(int8) * scale, which
        # is exactly embedding(weight_integer) * weight_scaling_factor.
        out_ref[:, 0 * d4:1 * d4] = ((w << 24) >> 24).astype(jnp.float32) * s
        out_ref[:, 1 * d4:2 * d4] = ((w << 16) >> 24).astype(jnp.float32) * s
        out_ref[:, 2 * d4:3 * d4] = ((w << 8) >> 24).astype(jnp.float32) * s
        out_ref[:, 3 * d4:4 * d4] = (w >> 24).astype(jnp.float32) * s
    else:
        out_ref[...] = w


def _gather_call(ids, table, scale, out_dim, nrows, tb, packed):
    tp = ids.shape[0]
    nblk = tp // tb
    kernel = functools.partial(_gather_kernel, tb=tb, nrows=nrows, packed=packed)

    if packed:
        in_specs = [
            pl.BlockSpec(memory_space=pltpu.MemorySpace.SMEM),  # scale (1,1)
            pl.BlockSpec(memory_space=pl.ANY),                  # packed table, HBM
        ]
        args = (ids, scale, table)
    else:
        in_specs = [pl.BlockSpec(memory_space=pl.ANY)]          # f32 table, HBM
        args = (ids, table)

    grid_spec = pltpu.PrefetchScalarGridSpec(
        num_scalar_prefetch=1,                  # token ids -> SMEM
        grid=(nblk,),
        in_specs=in_specs,
        out_specs=pl.BlockSpec((tb, out_dim), lambda i, ids_ref: (i, 0)),
        scratch_shapes=[
            pltpu.VMEM((2, tb, table.shape[1]), table.dtype),   # double-buffered rows
            pltpu.SemaphoreType.DMA((2,)),                      # one shared sem per slot
        ],
    )
    # "arbitrary": the manual double buffer carries state across consecutive
    # grid steps, so the token axis must stay sequential on one core.
    return pl.pallas_call(
        kernel,
        grid_spec=grid_spec,
        out_shape=jax.ShapeDtypeStruct((tp, out_dim), jnp.float32),
        compiler_params=pltpu.CompilerParams(dimension_semantics=("arbitrary",)),
    )(*args)


def embedding_lookup(ids_flat, table, *, out_dim, scale=None, num_valid_rows=None,
                     token_block=128, max_tokens_per_call=32768):
    """Row gather from `table` (HBM), optionally dequantizing.

    With `scale`, `table` is the packed int32 view (V, out_dim//4) of the int8
    weights and the result is int8_rows * scale; otherwise `table` is the f32
    weight (V, out_dim).  The call is chunked so the scalar-prefetched ids stay
    well inside SMEM for any batch*seq.
    """
    t_total = ids_flat.shape[0]
    nrows = num_valid_rows if num_valid_rows is not None else table.shape[0]
    packed = scale is not None
    tb = min(token_block, max(8, _round_up(t_total, 8)))
    chunk = max(tb, (max_tokens_per_call // tb) * tb)

    outs = []
    for c0 in range(0, t_total, chunk):
        ids_c = ids_flat[c0:min(c0 + chunk, t_total)]
        tc = ids_c.shape[0]
        tp = _round_up(tc, tb)
        if tp != tc:
            ids_c = jnp.pad(ids_c, (0, tp - tc))
        out_c = _gather_call(ids_c, table, scale, out_dim, nrows, tb, packed)
        outs.append(out_c if tp == tc else out_c[:tc])
    return outs[0] if len(outs) == 1 else jnp.concatenate(outs, axis=0)


# ---------------------------------------------------------------------------
# QEmbedding.forward equivalent
# ---------------------------------------------------------------------------
def qembedding_forward(x, weight, quant_it=QUANT_IT):
    """Returns (embedded, weight_scaling_factor, weight_integer).

    `weight_integer` (int8) / `weight_scaling_factor` correspond to the torch
    buffers the module updates in place; JAX is functional so they are returned.
    The non-quantized path returns (embedded, None, None).
    """
    b, s = x.shape
    v, d = weight.shape
    ids = x.reshape(-1).astype(jnp.int32)

    if not quant_it:
        emb = embedding_lookup(ids, weight, out_dim=d)
        return emb.reshape(b, s, d), None, None

    # TODO(synk): embedding dims not divisible by 4 would need an f32-row gather
    # fallback; all practical embedding dims are multiples of 4.
    assert d % 4 == 0, "quantized path requires embedding_dim % 4 == 0"

    tv = _row_tile(v, d)
    vp = _round_up(v, tv)                 # pad vocab so any V tiles cleanly
    w_pad = weight if vp == v else jnp.pad(weight, ((0, vp - v), (0, 0)))

    scale = compute_weight_scale(w_pad, tv)                      # (1,1) f32
    wint_pad, packed_pad = quantize_and_pack(w_pad, scale, tv)   # int8 / packed int32
    emb = embedding_lookup(ids, packed_pad, out_dim=d, scale=scale, num_valid_rows=v)

    weight_integer = wint_pad if vp == v else wint_pad[:v]
    return emb.reshape(b, s, d), scale.reshape(1), weight_integer


if __name__ == "__main__":
    key = jax.random.PRNGKey(0)
    k_w, k_x = jax.random.split(key)

    # V deliberately NOT a multiple of 32 to exercise the vocab-padding path;
    # D = 128 keeps the gather's output blocks lane-dense.
    num_embeddings, embedding_dim = 100, 128
    batch, seq = 2, 8

    # Deterministic "pretend-trained" weight (torch inits to zeros, which would
    # make the quantization scale degenerate).
    weight = jax.random.normal(k_w, (num_embeddings, embedding_dim), jnp.float32)
    x = jax.random.randint(k_x, (batch, seq), 0, num_embeddings, jnp.int32)

    emb, scale, weight_integer = qembedding_forward(x, weight)
    emb = jax.block_until_ready(emb)
    scale = jax.block_until_ready(scale)
    weight_integer = jax.block_until_ready(weight_integer)

    # Pure-JAX reference of the quantized forward.
    ref_scale = jnp.maximum(jnp.max(jnp.abs(weight)), 1e-8) / _QMAX
    ref_wint = jnp.clip(jnp.round(weight * (1.0 / ref_scale)), _QMIN, _QMAX)
    ref_emb = jnp.take(ref_wint, x, axis=0) * ref_scale

    assert emb.shape == (batch, seq, embedding_dim)
    assert scale.shape == (1,)
    assert weight_integer.shape == (num_embeddings, embedding_dim)
    assert weight_integer.dtype == jnp.int8
    assert jnp.allclose(scale[0], ref_scale, atol=1e-6, rtol=1e-6)
    assert jnp.array_equal(weight_integer, ref_wint.astype(jnp.int8))
    assert jnp.allclose(emb, ref_emb, atol=1e-5, rtol=1e-5)

    # Non-quantized path (QuantIt == False): plain embedding lookup, no scale.
    emb_fp, s_none, w_none = qembedding_forward(x, weight, quant_it=False)
    emb_fp = jax.block_until_ready(emb_fp)
    assert s_none is None and w_none is None
    assert jnp.allclose(emb_fp, jnp.take(weight, x, axis=0), atol=1e-6, rtol=1e-6)

    print("KERNEL_OK")
</pallas_src>

<mosaic_0001>
module attributes {stable_mosaic.version = 11 : i64} {
  func.func @_absmax_scale_kernel(%arg0: i32, %arg1: memref<128x128xf32, #tpu.memory_space<vmem>>, %arg2: memref<1x1xf32, #tpu.memory_space<vmem>>) attributes {dimension_semantics = [#tpu.dimension_semantics<arbitrary>], iteration_bounds = array<i64: 1>, scalar_prefetch = 0 : i64, scratch_operands = 0 : i64, tpu.core_type = #tpu.core_type<tc>, window_params = [{transform_indices = @transform_0, window_bounds = array<i64: 128, 128>}, {pipeline_mode = #tpu.pipeline_mode<synchronous>, transform_indices = @transform_1, window_bounds = array<i64: 1, 1>}]} {
    %c0_i32 = arith.constant 0 : i32
    %0 = arith.cmpi eq, %arg0, %c0_i32 : i32
    %1 = arith.extui %0 : i1 to i32
    %c0_i32_0 = arith.constant 0 : i32
    %2 = arith.cmpi ne, %1, %c0_i32_0 : i32
    scf.if %2 {
      %cst_8 = arith.constant 0.000000e+00 : f32
      %16 = vector.broadcast %cst_8 : f32 to vector<1x1xf32>
      %c0_9 = arith.constant 0 : index
      %c0_10 = arith.constant 0 : index
      %17 = vector.load %arg2[%c0_9, %c0_10] : memref<1x1xf32, #tpu.memory_space<vmem>>, vector<1x1xf32>
      tpu.vector_store %arg2[%c0_9, %c0_10], %16 {strides = array<i32>} : memref<1x1xf32, #tpu.memory_space<vmem>>, vector<1x1xf32>,
    } else {
    }
    %c0 = arith.constant 0 : index
    %c0_1 = arith.constant 0 : index
    %3 = vector.load %arg2[%c0, %c0_1] : memref<1x1xf32, #tpu.memory_space<vmem>>, vector<1x1xf32>
    %c0_2 = arith.constant 0 : index
    %c0_3 = arith.constant 0 : index
    %4 = vector.load %arg1[%c0_2, %c0_3] : memref<128x128xf32, #tpu.memory_space<vmem>>, vector<128x128xf32>
    %5 = math.absf %4 : vector<128x128xf32>
    %6 = vector.shape_cast %5 : vector<128x128xf32> to vector<1x128x128xf32>
    %cst = arith.constant dense<0xFF800000> : vector<1xf32>
    %7 = vector.multi_reduction <maximumf>, %6, %cst [1, 2] : vector<1x128x128xf32> to vector<1xf32>
    %8 = vector.shape_cast %7 : vector<1xf32> to vector<1x1x1xf32>
    %9 = vector.extract %8[0, 0, 0] : f32 from vector<1x1x1xf32>
    %10 = vector.broadcast %9 : f32 to vector<1x1xf32>
    %11 = arith.maximumf %3, %10 : vector<1x1xf32>
    %c0_4 = arith.constant 0 : index
    %c0_5 = arith.constant 0 : index
    %12 = vector.load %arg2[%c0_4, %c0_5] : memref<1x1xf32, #tpu.memory_space<vmem>>, vector<1x1xf32>
    tpu.vector_store %arg2[%c0_4, %c0_5], %11 {strides = array<i32>} : memref<1x1xf32, #tpu.memory_space<vmem>>, vector<1x1xf32>,
    %c0_i32_6 = arith.constant 0 : i32
    %13 = arith.cmpi eq, %arg0, %c0_i32_6 : i32
    %14 = arith.extui %13 : i1 to i32
    %c0_i32_7 = arith.constant 0 : i32
    %15 = arith.cmpi ne, %14, %c0_i32_7 : i32
    scf.if %15 {
      %c0_8 = arith.constant 0 : index
      %c0_9 = arith.constant 0 : index
      %16 = vector.load %arg2[%c0_8, %c0_9] : memref<1x1xf32, #tpu.memory_space<vmem>>, vector<1x1xf32>
      %cst_10 = arith.constant 9.99999993E-9 : f32
      %17 = vector.broadcast %cst_10 : f32 to vector<1x1xf32>
      %18 = arith.maximumf %16, %17 : vector<1x1xf32>
      %cst_11 = arith.constant 1.270000e+02 : f32
      %19 = vector.broadcast %cst_11 : f32 to vector<1x1xf32>
      %20 = arith.divf %18, %19 : vector<1x1xf32>
      %c0_12 = arith.constant 0 : index
      %c0_13 = arith.constant 0 : index
      %21 = vector.load %arg2[%c0_12, %c0_13] : memref<1x1xf32, #tpu.memory_space<vmem>>, vector<1x1xf32>
      tpu.vector_store %arg2[%c0_12, %c0_13], %20 {strides = array<i32>} : memref<1x1xf32, #tpu.memory_space<vmem>>, vector<1x1xf32>,
    } else {
    }
    return
  }
  func.func @transform_0(%arg0: i32) -> (i32, i32) {
    %c0_i32 = arith.constant 0 : i32
    %c0_i32_0 = arith.constant 0 : i32
    return %arg0, %c0_i32 : i32, i32
  }
  func.func @transform_1(%arg0: i32) -> (i32, i32) {
    %c0_i32 = arith.constant 0 : i32
    %c0_i32_0 = arith.constant 0 : i32
    %c0_i32_1 = arith.constant 0 : i32
    return %c0_i32, %c0_i32_0 : i32, i32
  }
}

</mosaic_0001>

<llo_original>
// kernel: tpu_custom_call.1
$region0: #{tpu_custom_call.1}
  #allocation0 [shape = 'u32[]', space=smem, size = 0x4, offset = 0x4, fixed_abs, tag = 'smem constant byte address 0x4 - core index']
  #allocation1 [shape = 'u32[144,128]{1,0:T(1,128)}', space=vmem, size = 0x12000, scoped, tag = 'internal scratch']
  %s0 = inlined_call_operand.hbm [shape: f32[128,128], index: 0, kind: input, shape index: {}]
  %s1 = inlined_call_operand.hbm [shape: f32[1,1], index: 1, kind: output, shape index: {}]
  %s2 = sld [smem:[#allocation0]]
  $region26: #{tpu_custom_call.1} parent=0
    _
  %s4 = ssub.s32 1, %s2
  %s5 = scalar_select 0, %s4, %s2
  $region1: #{tpu_custom_call.1} parent=0
    #allocation2 [shape = 'u8[65536]{0}', space=vmem, size = 0x10000, scoped, tag = 'input window, operand 0, single buffered']
    #allocation3 [shape = 's32[1]{0}', space=sflag, size = 0x4, scoped, tag = 'scoped memory for tpu_custom_call.1']
    #allocation4 [shape = 's32[1]{0}', space=sflag, size = 0x4, scoped, tag = 'scoped memory for tpu_custom_call.1']
    #allocation5 [shape = 'u8[512]{0}', space=vmem, size = 0x400, scoped, tag = 'output window, operand 0, single buffered']
    %6 = vsyncpa [#allocation3], 0
    %7 = vsyncpa [#allocation4], 0
    // Predicated region
    $region2: #{tpu_custom_call.1} parent=1 // pred_check
      _
    $region3: #{tpu_custom_call.1} parent=1 // pred_check_branch
      %9 = sbr.rel (0) target = $region5
    $region4: #{tpu_custom_call.1} parent=1 // pred_region
      %s11 = ssub.s32 2048, 2048
      %12 = vsyncadd [#allocation3], %s11
      %s13 = sshll.u32 [#allocation2], 4
      %s14 = int_to_ptr.vmem [resolvable:$true] %s13
      %19 = dma.hbm_to_vmem [thread:$0]  %s0, 2048, %s14, [#allocation3], 128, 128, 8
    $region5: #{tpu_custom_call.1} parent=1 // pred_fallthru
      _
    // Predicated region
    $region6: #{tpu_custom_call.1} parent=1 // pred_check
      _
    $region7: #{tpu_custom_call.1} parent=1 // pred_check_branch
      %21 = sbr.rel (0) target = $region9
    $region8: #{tpu_custom_call.1} parent=1 // pred_region
      %22 = dma.done [#allocation3], 2048
    $region9: #{tpu_custom_call.1} parent=1 // pred_fallthru
      _
    %p23 = scmp.eq.s32.totalorder 0, 0
    // Predicated region
    $region10: #{tpu_custom_call.1} parent=1 // pred_check
      %p24 = pneg %p23
    $region11: #{tpu_custom_call.1} parent=1 // pred_check_branch
      %26 = sbr.rel (%p24) target = $region13
    $region12: #{tpu_custom_call.1} parent=1 // pred_region
      %vm27 = vcmask 0
      %28 = vst.msk [vmem:[#allocation5] sm:$0x1] %vm27, 0.0
    $region13: #{tpu_custom_call.1} parent=1 // pred_fallthru
      _
    %v29 = vld [vmem:[#allocation5] sm:$0x1]
    %v30 = vld [vmem:[#allocation2] sm:$0xff]
    %v31 = vld [vmem:[#allocation2 + $0x8] sm:$0xff]
    %v32 = vld [vmem:[#allocation2 + $0x10] sm:$0xff]
    %v33 = vld [vmem:[#allocation2 + $0x18] sm:$0xff]
    %v34 = vld [vmem:[#allocation2 + $0x20] sm:$0xff]
    %v35 = vld [vmem:[#allocation2 + $0x28] sm:$0xff]
    %v36 = vld [vmem:[#allocation2 + $0x30] sm:$0xff]
    %v37 = vld [vmem:[#allocation2 + $0x38] sm:$0xff]
    %v38 = vld [vmem:[#allocation2 + $0x40] sm:$0xff]
    %v39 = vld [vmem:[#allocation2 + $0x48] sm:$0xff]
    %v40 = vld [vmem:[#allocation2 + $0x50] sm:$0xff]
    %v41 = vld [vmem:[#allocation2 + $0x58] sm:$0xff]
    %v42 = vld [vmem:[#allocation2 + $0x60] sm:$0xff]
    %v43 = vld [vmem:[#allocation2 + $0x68] sm:$0xff]
    %v44 = vld [vmem:[#allocation2 + $0x70] sm:$0xff]
    %v45 = vld [vmem:[#allocation2 + $0x78] sm:$0xff]
    %v46 = vand.u32 2147483647, %v30
    %v47 = vand.u32 2147483647, %v31
    %v48 = vand.u32 2147483647, %v32
    %v49 = vand.u32 2147483647, %v33
    %v50 = vand.u32 2147483647, %v34
    %v51 = vand.u32 2147483647, %v35
    %v52 = vand.u32 2147483647, %v36
    %v53 = vand.u32 2147483647, %v37
    %v54 = vand.u32 2147483647, %v38
    %v55 = vand.u32 2147483647, %v39
    %v56 = vand.u32 2147483647, %v40
    %v57 = vand.u32 2147483647, %v41
    %v58 = vand.u32 2147483647, %v42
    %v59 = vand.u32 2147483647, %v43
    %v60 = vand.u32 2147483647, %v44
    %v61 = vand.u32 2147483647, %v45
    %v62 = vmax.f32 %v46, %v50
    %v63 = vmax.f32 %v47, %v51
    %v64 = vmax.f32 %v48, %v52
    %v65 = vmax.f32 %v49, %v53
    %v66 = vmax.f32 %v62, %v54
    %v67 = vmax.f32 %v63, %v55
    %v68 = vmax.f32 %v64, %v56
    %v69 = vmax.f32 %v65, %v57
    %v70 = vmax.f32 %v66, %v58
    %v71 = vmax.f32 %v67, %v59
    %v72 = vmax.f32 %v68, %v60
    %v73 = vmax.f32 %v69, %v61
    %v74 = vmax.f32 %v70, %v71
    %v75 = vmax.f32 %v72, %v73
    %v76 = vmax.f32 %v74, %v75
    %77 = vmax.xlane.f32.xlu0 %v76
    %v78 = vpop.xlane.xlu0 %77
    %v79 = vrot.slane %v78, 4
    %v80 = vmax.f32 %v78, %v79
    %v81 = vrot.slane %v80, 2
    %v82 = vmax.f32 %v80, %v81
    %v83 = vrot.slane %v82, 1
    %v84 = vmax.f32 %v82, %v83
    %s85 = vtos %v84
    %v86 = vstv %s85
    %v87 = vmax.f32 %v29, %v86
    %vm88 = vcmask 0
    %89 = vst.msk [vmem:[#allocation5] sm:$0x1] %vm88, %v87
    // Predicated region
    $region14: #{tpu_custom_call.1} parent=1 // pred_check
      %p90 = pneg %p23
    $region15: #{tpu_custom_call.1} parent=1 // pred_check_branch
      %92 = sbr.rel (%p90) target = $region17
    $region16: #{tpu_custom_call.1} parent=1 // pred_region
      %v93 = vld [vmem:[#allocation5] sm:$0x1]
      %v94 = vmax.f32 %v93, 1e-08
      %v95 = vrcp.pop 127.0
      %v96 = vmul.f32 %v94, %v95
      %97 = vst.msk [vmem:[#allocation5] sm:$0x1] %vm88, %v96
    $region17: #{tpu_custom_call.1} parent=1 // pred_fallthru
      _
    // Predicated region
    $region18: #{tpu_custom_call.1} parent=1 // pred_check
      _
    $region19: #{tpu_custom_call.1} parent=1 // pred_check_branch
      %99 = sbr.rel (0) target = $region21
    $region20: #{tpu_custom_call.1} parent=1 // pred_region
      %s101 = ssub.s32 16, 16
      %102 = vsyncadd [#allocation4], %s101
      %s104 = sshll.u32 [#allocation5], 4
      %s105 = int_to_ptr.vmem [resolvable:$true] %s104
      %107 = dma.vmem_to_hbm [thread:$0]  %s105, 16, %s1, [#allocation4]
    $region21: #{tpu_custom_call.1} parent=1 // pred_fallthru
      _
    // Predicated region
    $region22: #{tpu_custom_call.1} parent=1 // pred_check
      _
    $region23: #{tpu_custom_call.1} parent=1 // pred_check_branch
      %109 = sbr.rel (0) target = $region25
    $region24: #{tpu_custom_call.1} parent=1 // pred_region
      %110 = dma.done [#allocation4], 16
    $region25: #{tpu_custom_call.1} parent=1 // pred_fallthru
      _
    %111 = vsyncpa [#allocation3], 1
    %112 = vsyncpa [#allocation4], 1

</llo_original>
